<compile_context>
chip_gen: v7x
topology: tpu7x:2x2x1
jax: 0.10.0
libtpu: 0.0.40
codegen_flags: <defaults>
</compile_context>

<pallas_src>
import functools

import jax
import jax.numpy as jnp
from jax import lax
from jax.experimental import pallas as pl
from jax.experimental.pallas import tpu as pltpu


def _autolabel_kernel(patch_ref, wproj_ref, wlog_ref, wbox_ref, out_ref, *, Q, T):
    # patch_ref : (Q, PD) bf16   -- one batch per grid step
    # wproj_ref : (PD, D) bf16
    # wlog_ref  : (D, T)  bf16
    # wbox_ref  : (D, 4)  bf16
    # out_ref   : (1, 8)  f32    -- packed: [box0..box3, logit, undef x3]

    # --- synthetic GroundingDINO head (MXU, bf16 in / f32 accumulate) ---
    feat = jnp.dot(patch_ref[...], wproj_ref[...],
                   preferred_element_type=jnp.float32)                 # (Q, D) f32
    feat_bf = feat.astype(jnp.bfloat16)
    pred_logits = jnp.dot(feat_bf, wlog_ref[...],
                          preferred_element_type=jnp.float32)          # (Q, T) f32
    box_logits = jnp.dot(feat_bf, wbox_ref[...],
                         preferred_element_type=jnp.float32)           # (Q, 4) f32

    # --- exact post-processing from GroundingDINO.predict_batch (f32 VPU/EUP) ---
    # logits, _ = pred_logits.max(2) : max over token dim (lane reduce, native layout)
    qmax = jnp.max(pred_logits, axis=1, keepdims=True)                 # (Q, 1)
    # logits, ind = logits.unsqueeze(-1).max(1) : best query, first-match argmax
    best = jnp.max(qmax, axis=0, keepdims=True)                        # (1, 1)
    q_pos = lax.broadcasted_iota(jnp.int32, (Q, 1), 0).astype(jnp.float32)
    # NOTE: relies on exact equality of qmax with its own max (exact here);
    # pathological all-NaN rows yield a zero box instead of row 0 (reference).
    ind = jnp.min(jnp.where(qmax == best, q_pos, float(Q)),
                  axis=0, keepdims=True)                               # (1, 1)
    # boxes = gather(pred_boxes, ind, 1).squeeze(1) : VPU select + sublane reduce
    mask = (q_pos == ind).astype(jnp.float32)                          # (Q, 1)
    box_raw = jnp.sum(mask * box_logits, axis=0, keepdims=True)        # (1, 4)
    # sigmoid after the gather (commutes with argmax/gather): 4 EUP ops per batch
    box = jax.nn.sigmoid(box_raw)                                      # (1, 4)

    # two sub-stores; lanes 5..7 are never read by the wrapper
    out_ref[:, 0:4] = box
    out_ref[:, 4:5] = best


def auto_label(obs, params, patch=4):
    """obs: (B, C, H, W) -> (boxes (B, 4), logits (B, 1))."""
    W_proj, W_log, W_box = params
    B, C, H, W = obs.shape
    p = patch
    Hp, Wp = H // p, W // p
    Q = Hp * Wp
    PD = C * p * p
    D = W_proj.shape[1]
    T = W_log.shape[1]

    # exp.obs.to(torch.float32) + patch extraction (glue). With
    # allow_input_fusion on this operand, XLA may fuse the rearrange + bf16
    # cast into the pallas_call operand instead of materializing it in HBM.
    x = obs.astype(jnp.float32)
    patches = x.reshape(B, C, Hp, p, Wp, p).transpose(0, 2, 4, 1, 3, 5)
    patches = patches.reshape(B, Q, PD).astype(jnp.bfloat16)

    wproj_bf = W_proj.astype(jnp.bfloat16)
    wlog_bf = W_log.astype(jnp.bfloat16)
    wbox_bf = W_box.astype(jnp.bfloat16)

    packed = pl.pallas_call(
        functools.partial(_autolabel_kernel, Q=Q, T=T),
        out_shape=jax.ShapeDtypeStruct((B, 1, 8), jnp.float32),
        grid=(B,),
        in_specs=[
            pl.BlockSpec((None, Q, PD), lambda i: (i, 0, 0)),   # one batch / step
            pl.BlockSpec((PD, D), lambda i: (0, 0)),            # weights resident
            pl.BlockSpec((D, T), lambda i: (0, 0)),
            pl.BlockSpec((D, 4), lambda i: (0, 0)),
        ],
        out_specs=pl.BlockSpec((None, 1, 8), lambda i: (i, 0, 0)),
        compiler_params=pltpu.CompilerParams(
            dimension_semantics=("parallel",),
            allow_input_fusion=[True, False, False, False],
        ),
    )(patches, wproj_bf, wlog_bf, wbox_bf)

    packed = packed.reshape(B, 8)
    boxes = packed[:, :4]     # gather(...).squeeze(1)
    logits = packed[:, 4:5]   # .max(1) keeps a trailing 1
    return boxes, logits


def _reference(obs, params, patch=4):
    """Pure-JAX reference with the same bf16-matmul / f32-accumulate numerics."""
    W_proj, W_log, W_box = params
    B, C, H, W = obs.shape
    p = patch
    Hp, Wp = H // p, W // p
    Q = Hp * Wp
    PD = C * p * p
    x = obs.astype(jnp.float32)
    patches = x.reshape(B, C, Hp, p, Wp, p).transpose(0, 2, 4, 1, 3, 5)
    patches = patches.reshape(B * Q, PD).astype(jnp.bfloat16)
    feat = jnp.dot(patches, W_proj.astype(jnp.bfloat16),
                   preferred_element_type=jnp.float32)
    feat_bf = feat.astype(jnp.bfloat16)
    pred_logits = jnp.dot(feat_bf, W_log.astype(jnp.bfloat16),
                          preferred_element_type=jnp.float32).reshape(B, Q, -1)
    pred_boxes = jax.nn.sigmoid(
        jnp.dot(feat_bf, W_box.astype(jnp.bfloat16),
                preferred_element_type=jnp.float32)).reshape(B, Q, 4)
    qmax = pred_logits.max(axis=2)                       # (B, Q)
    ind = jnp.argmax(qmax, axis=1)                       # (B,) first-match
    logits = qmax.max(axis=1, keepdims=True)             # (B, 1)
    boxes = pred_boxes[jnp.arange(B), ind]               # (B, 4)
    return boxes, logits


if __name__ == "__main__":
    # Small, deterministic shapes: batch=2, channels=4, spatial=16x16.
    B, C, H, W = 2, 4, 16, 16
    p = 4
    PD = C * p * p          # 64 patch features
    D = 32                  # hidden dim
    T = 8                   # synthetic caption token count ("little robot dog" + specials)

    key = jax.random.PRNGKey(0)
    k_obs, k_proj, k_log, k_box = jax.random.split(key, 4)
    obs = jax.random.normal(k_obs, (B, C, H, W), dtype=jnp.float32)
    W_proj = (0.02 * jax.random.normal(k_proj, (PD, D))).astype(jnp.float32)
    W_log = (0.02 * jax.random.normal(k_log, (D, T))).astype(jnp.float32)
    W_box = (0.02 * jax.random.normal(k_box, (D, 4))).astype(jnp.float32)
    params = (W_proj, W_log, W_box)

    # AutoLabel.forward: exp.label = boxes
    exp = {"obs": obs}
    boxes, logits = auto_label(exp["obs"], params, patch=p)
    jax.block_until_ready(boxes)
    jax.block_until_ready(logits)
    exp["label"] = boxes

    boxes_ref, logits_ref = _reference(obs, params, patch=p)
    assert boxes.shape == (B, 4) and logits.shape == (B, 1)
    assert jnp.allclose(boxes, boxes_ref, atol=1e-3, rtol=1e-3)
    assert jnp.allclose(logits, logits_ref, atol=1e-3, rtol=1e-3)
    print("KERNEL_OK")
</pallas_src>

<mosaic_0001>
module attributes {stable_mosaic.version = 11 : i64} {
  func.func @_autolabel_kernel(%arg0: i32, %arg1: memref<1x16x64xbf16, #tpu.memory_space<vmem>>, %arg2: memref<64x32xbf16, #tpu.memory_space<vmem>>, %arg3: memref<32x8xbf16, #tpu.memory_space<vmem>>, %arg4: memref<32x4xbf16, #tpu.memory_space<vmem>>, %arg5: memref<1x1x8xf32, #tpu.memory_space<vmem>>) attributes {dimension_semantics = [#tpu.dimension_semantics<parallel>], iteration_bounds = array<i64: 2>, scalar_prefetch = 0 : i64, scratch_operands = 0 : i64, tpu.core_type = #tpu.core_type<tc>, window_params = [{transform_indices = @transform_0, window_bounds = array<i64: 1, 16, 64>}, {pipeline_mode = #tpu.pipeline_mode<synchronous>, transform_indices = @transform_1, window_bounds = array<i64: 64, 32>}, {pipeline_mode = #tpu.pipeline_mode<synchronous>, transform_indices = @transform_2, window_bounds = array<i64: 32, 8>}, {pipeline_mode = #tpu.pipeline_mode<synchronous>, transform_indices = @transform_3, window_bounds = array<i64: 32, 4>}, {transform_indices = @transform_4, window_bounds = array<i64: 1, 1, 8>}]} {
    %c0 = arith.constant 0 : index
    %c0_0 = arith.constant 0 : index
    %c0_1 = arith.constant 0 : index
    %0 = vector.load %arg1[%c0, %c0_0, %c0_1] : memref<1x16x64xbf16, #tpu.memory_space<vmem>>, vector<1x16x64xbf16>
    %1 = vector.shape_cast %0 : vector<1x16x64xbf16> to vector<16x64xbf16>
    %c0_2 = arith.constant 0 : index
    %c0_3 = arith.constant 0 : index
    %2 = vector.load %arg2[%c0_2, %c0_3] : memref<64x32xbf16, #tpu.memory_space<vmem>>, vector<64x32xbf16>
    %cst = arith.constant dense<0.000000e+00> : vector<16x32xf32>
    %3 = tpu.matmul %1, %2, %cst {dimension_numbers = #tpu.dot_dimension_numbers<[1], [0], [0], [1], [0, 0, 1, 1], [], []>} : vector<16x64xbf16>, vector<64x32xbf16>, vector<16x32xf32> -> vector<16x32xf32>
    %4 = arith.truncf %3 : vector<16x32xf32> to vector<16x32xbf16>
    %c0_4 = arith.constant 0 : index
    %c0_5 = arith.constant 0 : index
    %5 = vector.load %arg3[%c0_4, %c0_5] : memref<32x8xbf16, #tpu.memory_space<vmem>>, vector<32x8xbf16>
    %cst_6 = arith.constant dense<0.000000e+00> : vector<16x8xf32>
    %6 = tpu.matmul %4, %5, %cst_6 {dimension_numbers = #tpu.dot_dimension_numbers<[1], [0], [0], [1], [0, 0, 1, 1], [], []>} : vector<16x32xbf16>, vector<32x8xbf16>, vector<16x8xf32> -> vector<16x8xf32>
    %c0_7 = arith.constant 0 : index
    %c0_8 = arith.constant 0 : index
    %7 = vector.load %arg4[%c0_7, %c0_8] : memref<32x4xbf16, #tpu.memory_space<vmem>>, vector<32x4xbf16>
    %cst_9 = arith.constant dense<0.000000e+00> : vector<16x4xf32>
    %8 = tpu.matmul %4, %7, %cst_9 {dimension_numbers = #tpu.dot_dimension_numbers<[1], [0], [0], [1], [0, 0, 1, 1], [], []>} : vector<16x32xbf16>, vector<32x4xbf16>, vector<16x4xf32> -> vector<16x4xf32>
    %cst_10 = arith.constant dense<0xFF800000> : vector<16xf32>
    %9 = vector.multi_reduction <maximumf>, %6, %cst_10 [1] : vector<16x8xf32> to vector<16xf32>
    %10 = vector.shape_cast %9 : vector<16xf32> to vector<16x1xf32>
    %cst_11 = arith.constant dense<0xFF800000> : vector<1xf32>
    %11 = vector.multi_reduction <maximumf>, %10, %cst_11 [0] : vector<16x1xf32> to vector<1xf32>
    %12 = vector.shape_cast %11 : vector<1xf32> to vector<1x1xf32>
    %13 = tpu.iota {dimensions = array<i32: 0>} : vector<16x1xi32>
    %14 = arith.sitofp %13 : vector<16x1xi32> to vector<16x1xf32>
    %15 = vector.broadcast %12 : vector<1x1xf32> to vector<16x1xf32>
    %16 = arith.cmpf oeq, %10, %15 : vector<16x1xf32>
    %cst_12 = arith.constant 1.600000e+01 : f32
    %17 = vector.broadcast %cst_12 : f32 to vector<16x1xf32>
    %18 = arith.select %16, %14, %17 : vector<16x1xi1>, vector<16x1xf32>
    %cst_13 = arith.constant dense<0x7F800000> : vector<1xf32>
    %19 = vector.multi_reduction <minimumf>, %18, %cst_13 [0] : vector<16x1xf32> to vector<1xf32>
    %20 = vector.shape_cast %19 : vector<1xf32> to vector<1x1xf32>
    %21 = vector.broadcast %20 : vector<1x1xf32> to vector<16x1xf32>
    %22 = arith.cmpf oeq, %14, %21 : vector<16x1xf32>
    %23 = arith.extui %22 : vector<16x1xi1> to vector<16x1xi32>
    %24 = arith.sitofp %23 : vector<16x1xi32> to vector<16x1xf32>
    %25 = vector.broadcast %24 : vector<16x1xf32> to vector<16x4xf32>
    %26 = arith.mulf %25, %8 : vector<16x4xf32>
    %cst_14 = arith.constant dense<0.000000e+00> : vector<4xf32>
    %27 = vector.multi_reduction <add>, %26, %cst_14 [0] : vector<16x4xf32> to vector<4xf32>
    %28 = vector.shape_cast %27 : vector<4xf32> to vector<1x4xf32>
    %29 = arith.negf %28 : vector<1x4xf32>
    %30 = math.exp %29 : vector<1x4xf32>
    %cst_15 = arith.constant 1.000000e+00 : f32
    %31 = vector.broadcast %cst_15 : f32 to vector<1x4xf32>
    %32 = arith.addf %31, %30 : vector<1x4xf32>
    %33 = arith.divf %31, %32 : vector<1x4xf32>
    %c0_16 = arith.constant 0 : index
    %c0_17 = arith.constant 0 : index
    %c0_18 = arith.constant 0 : index
    %34 = vector.load %arg5[%c0_16, %c0_17, %c0_18] : memref<1x1x8xf32, #tpu.memory_space<vmem>>, vector<1x1x4xf32>
    %35 = vector.shape_cast %34 : vector<1x1x4xf32> to vector<1x4xf32>
    %36 = vector.shape_cast %33 : vector<1x4xf32> to vector<1x1x4xf32>
    tpu.vector_store %arg5[%c0_16, %c0_17, %c0_18], %36 {strides = array<i32>} : memref<1x1x8xf32, #tpu.memory_space<vmem>>, vector<1x1x4xf32>,
    %c0_19 = arith.constant 0 : index
    %c0_20 = arith.constant 0 : index
    %c4 = arith.constant 4 : index
    %37 = vector.load %arg5[%c0_19, %c0_20, %c4] : memref<1x1x8xf32, #tpu.memory_space<vmem>>, vector<1x1x1xf32>
    %38 = vector.shape_cast %37 : vector<1x1x1xf32> to vector<1x1xf32>
    %39 = vector.shape_cast %12 : vector<1x1xf32> to vector<1x1x1xf32>
    tpu.vector_store %arg5[%c0_19, %c0_20, %c4], %39 {strides = array<i32>} : memref<1x1x8xf32, #tpu.memory_space<vmem>>, vector<1x1x1xf32>,
    return
  }
  func.func @transform_0(%arg0: i32) -> (i32, i32, i32) {
    %c0_i32 = arith.constant 0 : i32
    %c0_i32_0 = arith.constant 0 : i32
    %c0_i32_1 = arith.constant 0 : i32
    return %arg0, %c0_i32, %c0_i32_0 : i32, i32, i32
  }
  func.func @transform_1(%arg0: i32) -> (i32, i32) {
    %c0_i32 = arith.constant 0 : i32
    %c0_i32_0 = arith.constant 0 : i32
    %c0_i32_1 = arith.constant 0 : i32
    return %c0_i32, %c0_i32_0 : i32, i32
  }
  func.func @transform_2(%arg0: i32) -> (i32, i32) {
    %c0_i32 = arith.constant 0 : i32
    %c0_i32_0 = arith.constant 0 : i32
    %c0_i32_1 = arith.constant 0 : i32
    return %c0_i32, %c0_i32_0 : i32, i32
  }
  func.func @transform_3(%arg0: i32) -> (i32, i32) {
    %c0_i32 = arith.constant 0 : i32
    %c0_i32_0 = arith.constant 0 : i32
    %c0_i32_1 = arith.constant 0 : i32
    return %c0_i32, %c0_i32_0 : i32, i32
  }
  func.func @transform_4(%arg0: i32) -> (i32, i32, i32) {
    %c0_i32 = arith.constant 0 : i32
    %c0_i32_0 = arith.constant 0 : i32
    %c0_i32_1 = arith.constant 0 : i32
    return %arg0, %c0_i32, %c0_i32_0 : i32, i32, i32
  }
}

</mosaic_0001>

<llo_original>
// kernel: tpu_custom_call.1
$region0: #{tpu_custom_call.1}
  #allocation0 [shape = 'u32[]', space=smem, size = 0x4, offset = 0x4, fixed_abs, tag = 'smem constant byte address 0x4 - core index']
  #allocation1 [shape = 'u32[144,128]{1,0:T(1,128)}', space=vmem, size = 0x12000, scoped, tag = 'internal scratch']
  %s0 = inlined_call_operand.vmem [shape: bf16[2,16,64], index: 0, kind: input, shape index: {}]
  %s1 = inlined_call_operand.vmem [shape: bf16[64,32], index: 1, kind: input, shape index: {}]
  %s2 = inlined_call_operand.vmem [shape: bf16[32,8], index: 2, kind: input, shape index: {}]
  %s3 = inlined_call_operand.vmem [shape: bf16[32,4], index: 3, kind: input, shape index: {}]
  %s4 = inlined_call_operand.hbm [shape: f32[2,1,8], index: 4, kind: output, shape index: {}]
  %s5 = sld [smem:[#allocation0]]
  $region49: #{tpu_custom_call.1} parent=0
    _
  %s7 = ssub.s32 1, %s5
  %s8 = scalar_select 0, %s7, %s5
  $region1: #{tpu_custom_call.1} parent=0
    #allocation2 [shape = 'u8[1024]{0}', space=vmem, size = 0x400, scoped, tag = 'output window, operand 0']
    #allocation3 [shape = 's32[2]{0}', space=sflag, size = 0x8, scoped, tag = 'scoped memory for tpu_custom_call.1']
    %9 = vsyncpa [#allocation3], 0
    %s10 = scalar_lea.sflag [#allocation3], 1
    %11 = vsyncpa %s10, 0
    loop: start=0, step=1, limit=4
    $region2: #{tpu_custom_call.1} parent=1 // loop_pre_header
      _
    $region3: #{tpu_custom_call.1} parent=1 // loop_header
      %s13 = sphi 0, %s17
      %p14 = scmp.ge.s32.totalorder %s13, 4
      %s23 = sphi 0, %s25
      %s26 = sphi 0, %s23
      %s27 = sphi 0, %s26
      %s43 = sphi 0, %s27
      %s47 = sphi 0, %s47
      %s49 = sphi 0, %s47
      %s50 = sphi 0, %s49
      %s64 = sphi 0, %s50
      %s68 = sphi 0, %s68
      %s70 = sphi 0, %s68
      %s71 = sphi 0, %s70
      %s85 = sphi 0, %s71
      %s89 = sphi 0, %s89
      %s91 = sphi 0, %s89
      %s92 = sphi 0, %s91
      %s106 = sphi 0, %s92
      %s112 = sphi 0, %s114
      %s115 = sphi 0, %s112
      %s116 = sphi 0, %s115
      %s132 = sphi 0, %s116
    $region4: #{tpu_custom_call.1} parent=1 // loop_header_branch
      %16 = sbr.rel (%p14) target = $region8
    $region5: #{tpu_custom_call.1} parent=1 // loop_body
      %s18 = ssub.s32 %s13, 1
      %s19 = ssub.s32 %s13, 2
      %s20 = sadd.s32 %s13, 1
      %s21 = ssub.s32 %s13, %s20
      %p22 = scmp.eq.s32.totalorder %s21, 0
      %s24 = sadd.s32 %s23, 1
      %s25 = scalar_select %p22, %s23, %s24
      %p28 = pneg %p22
      %p29 = scmp.eq.s32.totalorder %s13, 1
      %p30 = por %p28, %p29
      %p31 = scmp.ne.s32.totalorder %s23, %s26
      %p32 = scmp.eq.s32.totalorder %s13, 0
      %p33 = por %p31, %p32
      %p34 = scmp.ne.s32.totalorder %s23, %s26
      %p35 = scmp.eq.s32.totalorder %s18, 1
      %p36 = por %p34, %p35
      %p37 = scmp.ne.s32.totalorder %s26, %s27
      %p38 = scmp.eq.s32.totalorder %s18, 0
      %p39 = por %p37, %p38
      %p40 = scmp.ne.s32.totalorder %s26, %s27
      %p41 = scmp.eq.s32.totalorder %s19, 1
      %p42 = por %p40, %p41
      %p44 = scmp.ne.s32.totalorder %s27, %s43
      %p45 = scmp.eq.s32.totalorder %s19, 0
      %p46 = por %p44, %p45
      %s48 = sadd.s32 %s47, 1
      %p51 = scmp.eq.s32.totalorder %s13, 1
      %p52 = scmp.ne.s32.totalorder %s47, %s49
      %p53 = scmp.eq.s32.totalorder %s13, 0
      %p54 = por %p52, %p53
      %p55 = scmp.ne.s32.totalorder %s47, %s49
      %p56 = scmp.eq.s32.totalorder %s18, 1
      %p57 = por %p55, %p56
      %p58 = scmp.ne.s32.totalorder %s49, %s50
      %p59 = scmp.eq.s32.totalorder %s18, 0
      %p60 = por %p58, %p59
      %p61 = scmp.ne.s32.totalorder %s49, %s50
      %p62 = scmp.eq.s32.totalorder %s19, 1
      %p63 = por %p61, %p62
      %p65 = scmp.ne.s32.totalorder %s50, %s64
      %p66 = scmp.eq.s32.totalorder %s19, 0
      %p67 = por %p65, %p66
      %s69 = sadd.s32 %s68, 1
      %p72 = scmp.eq.s32.totalorder %s13, 1
      %p73 = scmp.ne.s32.totalorder %s68, %s70
      %p74 = scmp.eq.s32.totalorder %s13, 0
      %p75 = por %p73, %p74
      %p76 = scmp.ne.s32.totalorder %s68, %s70
      %p77 = scmp.eq.s32.totalorder %s18, 1
      %p78 = por %p76, %p77
      %p79 = scmp.ne.s32.totalorder %s70, %s71
      %p80 = scmp.eq.s32.totalorder %s18, 0
      %p81 = por %p79, %p80
      %p82 = scmp.ne.s32.totalorder %s70, %s71
      %p83 = scmp.eq.s32.totalorder %s19, 1
      %p84 = por %p82, %p83
      %p86 = scmp.ne.s32.totalorder %s71, %s85
      %p87 = scmp.eq.s32.totalorder %s19, 0
      %p88 = por %p86, %p87
      %s90 = sadd.s32 %s89, 1
      %p93 = scmp.eq.s32.totalorder %s13, 1
      %p94 = scmp.ne.s32.totalorder %s89, %s91
      %p95 = scmp.eq.s32.totalorder %s13, 0
      %p96 = por %p94, %p95
      %p97 = scmp.ne.s32.totalorder %s89, %s91
      %p98 = scmp.eq.s32.totalorder %s18, 1
      %p99 = por %p97, %p98
      %p100 = scmp.ne.s32.totalorder %s91, %s92
      %p101 = scmp.eq.s32.totalorder %s18, 0
      %p102 = por %p100, %p101
      %p103 = scmp.ne.s32.totalorder %s91, %s92
      %p104 = scmp.eq.s32.totalorder %s19, 1
      %p105 = por %p103, %p104
      %p107 = scmp.ne.s32.totalorder %s92, %s106
      %p108 = scmp.eq.s32.totalorder %s19, 0
      %p109 = por %p107, %p108
      %s110 = ssub.s32 %s13, %s20
      %p111 = scmp.eq.s32.totalorder %s110, 0
      %s113 = sadd.s32 %s112, 1
      %s114 = scalar_select %p111, %s112, %s113
      %p117 = pneg %p111
      %p118 = scmp.eq.s32.totalorder %s13, 1
      %p119 = por %p117, %p118
      %p120 = scmp.ne.s32.totalorder %s112, %s115
      %p121 = scmp.eq.s32.totalorder %s13, 0
      %p122 = por %p120, %p121
      %p123 = scmp.ne.s32.totalorder %s112, %s115
      %p124 = scmp.eq.s32.totalorder %s18, 1
      %p125 = por %p123, %p124
      %p126 = scmp.ne.s32.totalorder %s115, %s116
      %p127 = scmp.eq.s32.totalorder %s18, 0
      %p128 = por %p126, %p127
      %p129 = scmp.ne.s32.totalorder %s115, %s116
      %p130 = scmp.eq.s32.totalorder %s19, 1
      %p131 = por %p129, %p130
      %p133 = scmp.ne.s32.totalorder %s116, %s132
      %p134 = scmp.eq.s32.totalorder %s19, 0
      %p135 = por %p133, %p134
      %p136 = scmp.le.s32.totalorder 1, %s13
      %p137 = scmp.lt.s32.totalorder %s13, 3
      %p138 = pnand %p136, %p137
      %p139 = pneg %p138
      // Predicated region
      $region9: #{tpu_custom_call.1} parent=5 // pred_check
        _
      $region10: #{tpu_custom_call.1} parent=5 // pred_check_branch
        %141 = sbr.rel (%p138) target = $region12
      $region11: #{tpu_custom_call.1} parent=5 // pred_region
        %s142 = ssub.s32 %s13, 1
        // Predicated region
        $region13: #{tpu_custom_call.1} parent=11 // pred_check
          %p143 = pneg %p60
        $region14: #{tpu_custom_call.1} parent=11 // pred_check_branch
          %145 = sbr.rel (%p143) target = $region16
        $region15: #{tpu_custom_call.1} parent=11 // pred_region
          _
        $region16: #{tpu_custom_call.1} parent=11 // pred_fallthru
          _
        // Predicated region
        $region17: #{tpu_custom_call.1} parent=11 // pred_check
          %p146 = pneg %p81
        $region18: #{tpu_custom_call.1} parent=11 // pred_check_branch
          %148 = sbr.rel (%p146) target = $region20
        $region19: #{tpu_custom_call.1} parent=11 // pred_region
          _
        $region20: #{tpu_custom_call.1} parent=11 // pred_fallthru
          _
        // Predicated region
        $region21: #{tpu_custom_call.1} parent=11 // pred_check
          %p149 = pneg %p102
        $region22: #{tpu_custom_call.1} parent=11 // pred_check_branch
          %151 = sbr.rel (%p149) target = $region24
        $region23: #{tpu_custom_call.1} parent=11 // pred_region
          _
        $region24: #{tpu_custom_call.1} parent=11 // pred_fallthru
          _
      $region12: #{tpu_custom_call.1} parent=5 // pred_fallthru
        _
      %p152 = scmp.lt.s32.totalorder %s13, 2
      // Predicated region
      $region25: #{tpu_custom_call.1} parent=5 // pred_check
        %p153 = pneg %p152
      $region26: #{tpu_custom_call.1} parent=5 // pred_check_branch
        %155 = sbr.rel (%p153) target = $region28
      $region27: #{tpu_custom_call.1} parent=5 // pred_region
        // Predicated region
        $region29: #{tpu_custom_call.1} parent=27 // pred_check
          %p156 = pneg %p33
        $region30: #{tpu_custom_call.1} parent=27 // pred_check_branch
          %158 = sbr.rel (%p156) target = $region32
        $region31: #{tpu_custom_call.1} parent=27 // pred_region
          %p159 = scmp.lt.s32.totalorder %s13, 1
          %s160 = scalar_select %p159, %s13, 1
          %s161 = smul.addr %s160, 2
          %s162 = smul.addr %s161, 4
          %s163 = scalar_lea.vmem %s0, %s162
        $region32: #{tpu_custom_call.1} parent=27 // pred_fallthru
          _
      $region28: #{tpu_custom_call.1} parent=5 // pred_fallthru
        _
      %p164 = scmp.le.s32.totalorder 1, %s13
      %p165 = scmp.lt.s32.totalorder %s13, 3
      %p166 = pnand %p164, %p165
      %p167 = pneg %p166
      // Predicated region
      $region33: #{tpu_custom_call.1} parent=5 // pred_check
        _
      $region34: #{tpu_custom_call.1} parent=5 // pred_check_branch
        %169 = sbr.rel (%p166) target = $region36
      $region35: #{tpu_custom_call.1} parent=5 // pred_region
        %s170 = ssub.s32 %s13, 1
        %p171 = scmp.lt.s32.totalorder %s18, 1
        %s172 = scalar_select %p171, %s18, 1
        %s173 = smul.addr %s172, 2
        %s174 = smul.addr %s173, 4
        %s175 = scalar_lea.vmem %s0, %s174
        %p176 = pneg %p39
        %p177 = pneg %p36
        %p178 = pneg %p60
        %p179 = pneg %p57
        %p180 = pneg %p81
        %p181 = pneg %p78
        %p182 = pneg %p102
        %p183 = pneg %p99
        %p184 = pneg %p128
        %p185 = pneg %p125
        %s186 = sand.u32 %s115, 1
        %s187 = scalar_lea.sflag [#allocation3], %s186
        %s188 = sand.u32 %s115, 1
        %s189 = scalar_lea.vmem [#allocation2], %s188
        %p190 = scmp.lt.s32.totalorder %s18, 1
        %s191 = scalar_select %p190, %s18, 1
        %s192 = smul.addr %s191, 2
        %s193 = smul.addr %s192, 4
        %s194 = scalar_lea.vmem %s0, %s193
        %v196 = vld [vmem:[%s194] sm:$0xf]
        %v197 = vld [vmem:[%s194 + $0x4] sm:$0xf]
        %v198 = vld [vmem:[%s1] sm:$0xf]
        %v199 = vld [vmem:[%s1 + $0x4] sm:$0xf]
        %v200 = vld [vmem:[%s1 + $0x8] sm:$0xf]
        %v201 = vld [vmem:[%s1 + $0xc] sm:$0xf]
        %v202 = vld [vmem:[%s1 + $0x10] sm:$0xf]
        %v203 = vld [vmem:[%s1 + $0x14] sm:$0xf]
        %v204 = vld [vmem:[%s1 + $0x18] sm:$0xf]
        %v205 = vld [vmem:[%s1 + $0x1c] sm:$0xf]
        %v208 = vunpack.c.l.b16 %v196
        %v209 = vunpack.c.l.b16 %v197
        %v210 = vpack.c.b16 %v209, %v208
        %v219 = vunpack.c.l.b16 %v198
        %v220 = vunpack.c.l.b16 %v199
        %v221 = vunpack.c.l.b16 %v200
        %v222 = vunpack.c.l.b16 %v201
        %v223 = vunpack.c.l.b16 %v202
        %v224 = vunpack.c.l.b16 %v203
        %v225 = vunpack.c.l.b16 %v204
        %v226 = vunpack.c.l.b16 %v205
        %v227 = vpack.c.b16 %v220, %v219
        %v228 = vpack.c.b16 %v222, %v221
        %v229 = vpack.c.b16 %v224, %v223
        %v230 = vpack.c.b16 %v226, %v225
        %vm235 = vcmask 523264
        %v237 = vsel %vm235, %v210, 0
        %239 = vmatprep.subr.bf16.mxu0 0
        %240 = vmatpush1.bf16.msra.mxu0 %v227
        %241 = vmatprep.subr.bf16.mxu0 0
        %242 = vmatpush1.bf16.msra.mxu0 %v228
        %243 = vmatprep.subr.bf16.mxu0 0
        %244 = vmatpush1.bf16.msra.mxu0 %v229
        %245 = vmatprep.subr.bf16.mxu0 0
        %246 = vmatpush1.bf16.msra.mxu0 %v230
        %247 = vmatprep.subr.bf16.mxu0 0
        %248 = vmatpush1.bf16.msra.mxu0 0
        %249 = vmatprep.subr.bf16.mxu0 0
        %250 = vmatpush1.bf16.msra.mxu0 0
        %251 = vmatprep.subr.bf16.mxu0 0
        %252 = vmatpush1.bf16.msra.mxu0 0
        %253 = vmatprep.subr.bf16.mxu0 0
        %254 = vmatpush1.bf16.msra.mxu0 0
        %255 = vmatprep.subr.bf16.mxu0 0
        %256 = vmatpush1.bf16.msra.mxu0 0
        %257 = vmatprep.subr.bf16.mxu0 0
        %258 = vmatpush1.bf16.msra.mxu0 0
        %259 = vmatprep.subr.bf16.mxu0 0
        %260 = vmatpush1.bf16.msra.mxu0 0
        %261 = vmatprep.subr.bf16.mxu0 0
        %262 = vmatpush1.bf16.msra.mxu0 0
        %263 = vmatprep.subr.bf16.mxu0 0
        %264 = vmatpush1.bf16.msra.mxu0 0
        %265 = vmatprep.subr.bf16.mxu0 0
        %266 = vmatpush1.bf16.msra.mxu0 0
        %267 = vmatprep.subr.bf16.mxu0 0
        %268 = vmatpush1.bf16.msra.mxu0 0
        %269 = vmatprep.subr.bf16.mxu0 0
        %270 = vmatpush1.bf16.msra.mxu0 0
        %271 = vmatprep.mubr.bf16.mxu0 0
        %272 = vmatmul.mubr.bf16.gmra.mrb[0].mxu0 %v237
        %v273 = vpop.f32.mrb[0].mxu0
        %v274 = vadd.f32 0.0, %v273
        %v275 = vpop.f32.mrb[0].mxu0
        %v276 = vpop.f32.mrb[0].mxu0
        %v277 = vadd.f32 0.0, %v276
        %v278 = vpop.f32.mrb[0].mxu0
        %279 = vdwg.mxu0
        %v280 = vpack.c.bf16 %v277, %v274
        %v281 = vld [vmem:[%s2] sm:$0xf]
        %v282 = vld [vmem:[%s2 + $0x4] sm:$0xf]
        %v283 = vld [vmem:[%s2 + $0x8] sm:$0xf]
        %v284 = vld [vmem:[%s2 + $0xc] sm:$0xf]
        %v289 = vunpack.c.l.b16 %v281
        %v290 = vunpack.c.l.b16 %v282
        %v291 = vunpack.c.l.b16 %v283
        %v292 = vunpack.c.l.b16 %v284
        %v293 = vpack.c.b16 %v290, %v289
        %v294 = vpack.c.b16 %v292, %v291
        %vm297 = vcmask 261120
        %v299 = vsel %vm297, %v280, 0
        %301 = vmatprep.subr.bf16.mxu0 0
        %302 = vmatpush1.bf16.msra.mxu0 %v293
        %303 = vmatprep.subr.bf16.mxu0 0
        %304 = vmatpush1.bf16.msra.mxu0 %v294
        %305 = vmatprep.subr.bf16.mxu0 0
        %306 = vmatpush1.bf16.msra.mxu0 0
        %307 = vmatprep.subr.bf16.mxu0 0
        %308 = vmatpush1.bf16.msra.mxu0 0
        %309 = vmatprep.subr.bf16.mxu0 0
        %310 = vmatpush1.bf16.msra.mxu0 0
        %311 = vmatprep.subr.bf16.mxu0 0
        %312 = vmatpush1.bf16.msra.mxu0 0
        %313 = vmatprep.subr.bf16.mxu0 0
        %314 = vmatpush1.bf16.msra.mxu0 0
        %315 = vmatprep.subr.bf16.mxu0 0
        %316 = vmatpush1.bf16.msra.mxu0 0
        %317 = vmatprep.subr.bf16.mxu0 0
        %318 = vmatpush1.bf16.msra.mxu0 0
        %319 = vmatprep.subr.bf16.mxu0 0
        %320 = vmatpush1.bf16.msra.mxu0 0
        %321 = vmatprep.subr.bf16.mxu0 0
        %322 = vmatpush1.bf16.msra.mxu0 0
        %323 = vmatprep.subr.bf16.mxu0 0
        %324 = vmatpush1.bf16.msra.mxu0 0
        %325 = vmatprep.subr.bf16.mxu0 0
        %326 = vmatpush1.bf16.msra.mxu0 0
        %327 = vmatprep.subr.bf16.mxu0 0
        %328 = vmatpush1.bf16.msra.mxu0 0
        %329 = vmatprep.subr.bf16.mxu0 0
        %330 = vmatpush1.bf16.msra.mxu0 0
        %331 = vmatprep.subr.bf16.mxu0 0
        %332 = vmatpush1.bf16.msra.mxu0 0
        %333 = vmatprep.mubr.bf16.mxu0 0
        %334 = vmatmul.mubr.bf16.gmra.mrb[0].mxu0 %v299
        %v335 = vpop.f32.mrb[0].mxu0
        %v336 = vadd.f32 0.0, %v335
        %v337 = vpop.f32.mrb[0].mxu0
        %v338 = vpop.f32.mrb[0].mxu0
        %v339 = vadd.f32 0.0, %v338
        %v340 = vpop.f32.mrb[0].mxu0
        %341 = vdwg.mxu0
        %v342 = vld [vmem:[%s3] sm:$0xf]
        %v343 = vld [vmem:[%s3 + $0x4] sm:$0xf]
        %v344 = vld [vmem:[%s3 + $0x8] sm:$0xf]
        %v345 = vld [vmem:[%s3 + $0xc] sm:$0xf]
        %v350 = vunpack.c.l.b16 %v342
        %v351 = vunpack.c.l.b16 %v343
        %v352 = vunpack.c.l.b16 %v344
        %v353 = vunpack.c.l.b16 %v345
        %v354 = vpack.c.b16 %v351, %v350
        %v355 = vpack.c.b16 %v353, %v352
        %358 = vmatprep.subr.bf16.mxu0 0
        %359 = vmatpush1.bf16.msra.mxu0 %v354
        %360 = vmatprep.subr.bf16.mxu0 0
        %361 = vmatpush1.bf16.msra.mxu0 %v355
        %362 = vmatprep.subr.bf16.mxu0 0
        %363 = vmatpush1.bf16.msra.mxu0 0
        %364 = vmatprep.subr.bf16.mxu0 0
        %365 = vmatpush1.bf16.msra.mxu0 0
        %366 = vmatprep.subr.bf16.mxu0 0
        %367 = vmatpush1.bf16.msra.mxu0 0
        %368 = vmatprep.subr.bf16.mxu0 0
        %369 = vmatpush1.bf16.msra.mxu0 0
        %370 = vmatprep.subr.bf16.mxu0 0
        %371 = vmatpush1.bf16.msra.mxu0 0
        %372 = vmatprep.subr.bf16.mxu0 0
        %373 = vmatpush1.bf16.msra.mxu0 0
        %374 = vmatprep.subr.bf16.mxu0 0
        %375 = vmatpush1.bf16.msra.mxu0 0
        %376 = vmatprep.subr.bf16.mxu0 0
        %377 = vmatpush1.bf16.msra.mxu0 0
        %378 = vmatprep.subr.bf16.mxu0 0
        %379 = vmatpush1.bf16.msra.mxu0 0
        %380 = vmatprep.subr.bf16.mxu0 0
        %381 = vmatpush1.bf16.msra.mxu0 0
        %382 = vmatprep.subr.bf16.mxu0 0
        %383 = vmatpush1.bf16.msra.mxu0 0
        %384 = vmatprep.subr.bf16.mxu0 0
        %385 = vmatpush1.bf16.msra.mxu0 0
        %386 = vmatprep.subr.bf16.mxu0 0
        %387 = vmatpush1.bf16.msra.mxu0 0
        %388 = vmatprep.subr.bf16.mxu0 0
        %389 = vmatpush1.bf16.msra.mxu0 0
        %390 = vmatprep.mubr.bf16.mxu0 0
        %391 = vmatmul.mubr.bf16.gmra.mrb[0].mxu0 %v299
        %v392 = vpop.f32.mrb[0].mxu0
        %v393 = vadd.f32 0.0, %v392
        %v394 = vpop.f32.mrb[0].mxu0
        %v395 = vpop.f32.mrb[0].mxu0
        %v396 = vadd.f32 0.0, %v395
        %v397 = vpop.f32.mrb[0].mxu0
        %398 = vdwg.mxu0
        %vm399 = vcmask 64512
        %v400 = vsel %vm399, %v336, -inf
        %401 = vmax.xlane.f32.xlu0 %v400
        %v402 = vpop.xlane.xlu0 %401
        %v403 = vsel %vm399, %v339, -inf
        %404 = vmax.xlane.f32.xlu0 %v403
        %v405 = vpop.xlane.xlu0 %404
        %v406 = vmax.f32 %v402, %v405
        %v407 = vrot.slane %v406, 4
        %v408 = vmax.f32 %v406, %v407
        %v409 = vrot.slane %v408, 2
        %v410 = vmax.f32 %v408, %v409
        %v411 = vrot.slane %v410, 1
        %v412 = vmax.f32 %v410, %v411
        %v413 = vlaneseq
        %v414 = vshrl.u32 %v413, 7
        %v415 = vadd.s32 %v414, 8
        %v416 = vcvt.s32.f32 %v414
        %v417 = vcvt.s32.f32 %v415
        %vm418 = vcmp.eq.f32.partialorder %v402, %v412
        %vm419 = vcmp.eq.f32.partialorder %v405, %v412
        %v420 = vsel %vm418, %v416, 16.0
        %v421 = vsel %vm419, %v417, 16.0
        %v422 = vmin.f32 %v420, %v421
        %v423 = vrot.slane %v422, 4
        %v424 = vmin.f32 %v422, %v423
        %v425 = vrot.slane %v424, 2
        %v426 = vmin.f32 %v424, %v425
        %v427 = vrot.slane %v426, 1
        %v428 = vmin.f32 %v426, %v427
        %vm429 = vcmp.eq.f32.partialorder %v416, %v428
        %vm430 = vcmp.eq.f32.partialorder %v417, %v428
        %v431 = vsel %vm429, 1, 0
        %v432 = vsel %vm430, 1, 0
        %v433 = vcvt.s32.f32 %v431
        %v434 = vcvt.s32.f32 %v432
        %v435 = vmul.f32 %v433, %v393
        %v436 = vmul.f32 %v434, %v396
        %vm437 = vcmask 31744
        %v438 = vsel %vm437, %v435, 0.0
        %v439 = vsel %vm437, %v436, 0.0
        %v440 = vadd.f32 %v438, %v439
        %v441 = vrot.slane %v440, 4
        %v442 = vadd.f32 %v440, %v441
        %v443 = vrot.slane %v442, 2
        %v444 = vadd.f32 %v442, %v443
        %v445 = vrot.slane %v444, 1
        %v446 = vadd.f32 %v444, %v445
        %v447 = vxor.u32 %v446, 2147483648
        %v448 = vmul.f32 %v447, 1.442695
        %v449 = vpow.pop %v448
        %v450 = vadd.f32 %v449, 1.0
        %v451 = vrcp.pop %v450
        %v452 = vmul.f32 1.0, %v451
        %vm453 = vcmask 24576
        %454 = vst.msk [vmem:[%s189] sm:$0x1] %vm453, %v452
        %vm455 = vcmask 32800
        %456 = vst.msk [vmem:[%s189] sm:$0x1] %vm455, %v412
        %s457 = sand.u32 %s115, 1
        %s458 = scalar_lea.sflag [#allocation3], %s457
        %s459 = sand.u32 %s115, 1
        %s460 = scalar_lea.vmem [#allocation2], %s459
        // Predicated region
        $region37: #{tpu_custom_call.1} parent=35 // pred_check
          %p461 = pneg %p125
        $region38: #{tpu_custom_call.1} parent=35 // pred_check_branch
          %463 = sbr.rel (%p461) target = $region40
        $region39: #{tpu_custom_call.1} parent=35 // pred_region
          %s465 = ssub.s32 16, 16
          %466 = vsyncadd %s458, %s465
          %s467 = smul.addr %s18, 16
          %s468 = scalar_lea.hbm %s4, %s467
          %s470 = sshll.u32 %s460, 4
          %s471 = int_to_ptr.vmem [resolvable:$true] %s470
          %473 = dma.vmem_to_hbm [thread:$0]  %s471, 16, %s468, %s458
        $region40: #{tpu_custom_call.1} parent=35 // pred_fallthru
          _
      $region36: #{tpu_custom_call.1} parent=5 // pred_fallthru
        _
      %p474 = scmp.le.s32.totalorder 2, %s13
      // Predicated region
      $region41: #{tpu_custom_call.1} parent=5 // pred_check
        %p475 = pneg %p474
      $region42: #{tpu_custom_call.1} parent=5 // pred_check_branch
        %477 = sbr.rel (%p475) target = $region44
      $region43: #{tpu_custom_call.1} parent=5 // pred_region
        %s478 = ssub.s32 %s13, 2
        // Predicated region
        $region45: #{tpu_custom_call.1} parent=43 // pred_check
          %p479 = pneg %p131
        $region46: #{tpu_custom_call.1} parent=43 // pred_check_branch
          %481 = sbr.rel (%p479) target = $region48
        $region47: #{tpu_custom_call.1} parent=43 // pred_region
          %s482 = sand.u32 %s116, 1
          %s483 = scalar_lea.sflag [#allocation3], %s482
          %s484 = sand.u32 %s116, 1
          %s485 = scalar_lea.vmem [#allocation2], %s484
          %486 = dma.done %s483, 16
        $region48: #{tpu_custom_call.1} parent=43 // pred_fallthru
          _
      $region44: #{tpu_custom_call.1} parent=5 // pred_fallthru
        _
    $region6: #{tpu_custom_call.1} parent=1 // loop_footer
      %s17 = sadd.s32 1, %s13
    $region7: #{tpu_custom_call.1} parent=1 // loop_footer_branch
      %12 = sbr.rel target = $region3
    $region8: #{tpu_custom_call.1} parent=1 // loop_exit
      _
    %487 = vsyncpa [#allocation3], 1
    %s488 = scalar_lea.sflag [#allocation3], 1
    %489 = vsyncpa %s488, 1

</llo_original>
